<compile_context>
chip_gen: v7x
topology: tpu7x:2x2x1
jax: 0.10.0
libtpu: 0.0.40
codegen_flags: <defaults>
</compile_context>

<pallas_src>
import functools

import jax
import jax.numpy as jnp
from jax.experimental import pallas as pl
from jax.experimental.pallas import tpu as pltpu

LANES = 128
SUBLANES = 8
MAX_TILE_ROWS = 1024      # (1024, 128) f32 tile = 512 KiB
NUM_SPLITS = 2            # leading "parallel" grid axis (v7x has 2 TensorCores)
MC_MAX_TILE_PIX = 2048    # pixels per step for the multi-class (softmax) path
PAD_LOGIT = -100.0        # padding value that yields exactly-zero focal loss


def _cdiv(a, b):
    return -(-a // b)


# ----------------------------------------------------------------------------
# Binary (single logit channel, sigmoid) path.
# ----------------------------------------------------------------------------
def _focal_bin_kernel(gt_ref, x_ref, out_ref, *, gamma, w0, w1, use_weight):
    """Per-split vector accumulator of the binary focal loss.

    gt_ref : VMEM (tile_rows, 128) bf16  targets in {0, 1}
    x_ref  : VMEM (tile_rows, 128) f32   logits
    out_ref: VMEM (tile_rows, 128) f32   resident accumulator (one block per split)
    """
    step = pl.program_id(1)

    @pl.when(step == 0)
    def _():
        out_ref[...] = jnp.zeros_like(out_ref)

    x = x_ref[...]
    y = gt_ref[...].astype(jnp.float32)

    # Logit of the ground-truth class; p_t = sigmoid(z).
    z = (2.0 * y - 1.0) * x
    # log p_t = log sigmoid(z) = -softplus(-z)   (numerically stable)
    log_pt = -(jnp.maximum(-z, 0.0) + jnp.log1p(jnp.exp(-jnp.abs(z))))
    pt = jnp.exp(log_pt)
    om = 1.0 - pt
    focal = om * om if gamma == 2.0 else jnp.power(om, jnp.float32(gamma))
    loss = -focal * log_pt
    if use_weight:
        loss = loss * (w0 + (w1 - w0) * y)   # == weight[gt] for gt in {0, 1}
    out_ref[...] += loss


def _focal_binary(gt, logits, weight, gamma):
    n = logits.size                                     # static python int
    x_flat = logits.reshape(-1).astype(jnp.float32)
    y_flat = gt.reshape(-1).astype(jnp.bfloat16)        # {0,1}: exact in bf16

    rows = _cdiv(n, LANES)
    rows = _cdiv(rows, SUBLANES) * SUBLANES
    if rows <= MAX_TILE_ROWS:
        tile_rows, n_split, steps = rows, 1, 1
    else:
        tile_rows = MAX_TILE_ROWS
        n_split = NUM_SPLITS
        steps = _cdiv(_cdiv(rows, tile_rows), n_split)
    total_rows = tile_rows * n_split * steps
    pad = total_rows * LANES - n

    # Padded elements (gt=0, logit=-100) produce exactly zero loss -> no in-kernel mask.
    x2d = jnp.pad(x_flat, (0, pad), constant_values=PAD_LOGIT).reshape(total_rows, LANES)
    y2d = jnp.pad(y_flat, (0, pad)).reshape(total_rows, LANES)

    if weight is not None:
        w0, w1 = float(weight[0]), float(weight[1])
    else:
        w0 = w1 = 1.0
    kernel = functools.partial(
        _focal_bin_kernel, gamma=float(gamma), w0=w0, w1=w1,
        use_weight=weight is not None)

    partials = pl.pallas_call(
        kernel,
        out_shape=jax.ShapeDtypeStruct((n_split * tile_rows, LANES), jnp.float32),
        grid_spec=pltpu.PrefetchScalarGridSpec(
            num_scalar_prefetch=0,
            grid=(n_split, steps),
            in_specs=[
                pl.BlockSpec((tile_rows, LANES), lambda c, i: (c * steps + i, 0)),
                pl.BlockSpec((tile_rows, LANES), lambda c, i: (c * steps + i, 0)),
            ],
            out_specs=pl.BlockSpec((tile_rows, LANES), lambda c, i: (c, 0)),
        ),
        compiler_params=pltpu.CompilerParams(
            dimension_semantics=("parallel", "arbitrary")),
    )(y2d, x2d)

    # Tiny wrapper-side reduction of the per-split vector accumulators.
    return jnp.sum(partials) / jnp.float32(n)


# ----------------------------------------------------------------------------
# Multi-class (softmax over channel dim) path.
# ----------------------------------------------------------------------------
def _focal_mc_kernel(gt_ref, x_ref, out_ref, *, gamma, weight, num_classes):
    """Per-pixel multi-class focal loss; small static class axis is unrolled.

    gt_ref : VMEM (tile, 1) int32  class indices
    x_ref  : VMEM (tile, C) f32    logits (pixels on sublanes, classes on lanes)
    out_ref: VMEM (tile, 1) f32    per-pixel focal loss
    """
    gt = gt_ref[...]
    cols = [x_ref[:, c:c + 1] for c in range(num_classes)]      # each (tile, 1)

    m = cols[0]
    for c in range(1, num_classes):
        m = jnp.maximum(m, cols[c])
    denom = jnp.zeros_like(m)
    x_t = jnp.zeros_like(m)
    w_t = jnp.zeros_like(m) if weight is not None else None
    for c in range(num_classes):
        denom = denom + jnp.exp(cols[c] - m)
        sel = (gt == c).astype(jnp.float32)
        x_t = x_t + sel * cols[c]
        if weight is not None:
            w_t = w_t + sel * float(weight[c])

    log_pt = (x_t - m) - jnp.log(denom)          # log softmax(x)[gt]
    pt = jnp.exp(log_pt)
    om = 1.0 - pt
    focal = om * om if gamma == 2.0 else jnp.power(om, jnp.float32(gamma))
    loss = -focal * log_pt
    if weight is not None:
        loss = loss * w_t
    out_ref[...] = loss


def _focal_multiclass(gt, logits, weight, gamma):
    B, C, H, W = logits.shape
    n = B * H * W                                       # static python int
    x = jnp.transpose(logits, (0, 2, 3, 1)).reshape(n, C).astype(jnp.float32)
    g = gt.reshape(n).astype(jnp.int32)

    rows = _cdiv(n, SUBLANES) * SUBLANES
    tile = min(MC_MAX_TILE_PIX, rows)
    steps = _cdiv(rows, tile)
    total = tile * steps
    pad = total - n
    if pad:
        # Padded pixels: gt=0 with a near-one-hot logit row -> exactly zero loss.
        pad_x = jnp.full((pad, C), PAD_LOGIT, jnp.float32).at[:, 0].set(-PAD_LOGIT)
        x = jnp.concatenate([x, pad_x], axis=0)
        g = jnp.concatenate([g, jnp.zeros((pad,), jnp.int32)], axis=0)
    g2d = g.reshape(total, 1)

    kernel = functools.partial(
        _focal_mc_kernel, gamma=float(gamma),
        weight=None if weight is None else tuple(float(w) for w in weight),
        num_classes=C)

    loss_px = pl.pallas_call(
        kernel,
        out_shape=jax.ShapeDtypeStruct((total, 1), jnp.float32),
        grid_spec=pltpu.PrefetchScalarGridSpec(
            num_scalar_prefetch=0,
            grid=(steps,),
            in_specs=[
                pl.BlockSpec((tile, 1), lambda i: (i, 0)),
                pl.BlockSpec((tile, C), lambda i: (i, 0)),
            ],
            out_specs=pl.BlockSpec((tile, 1), lambda i: (i, 0)),
        ),
        compiler_params=pltpu.CompilerParams(
            dimension_semantics=("parallel",)),
    )(g2d, x)

    return jnp.sum(loss_px) / jnp.float32(n)


# ----------------------------------------------------------------------------
# Public entry point (mirrors FocalLoss.__init__ hyperparameters + forward).
# ----------------------------------------------------------------------------
# TODO(synk): `weight`/`gamma` are __init__ hyperparameters and are baked in as
# compile-time constants; supporting a runtime weight tensor would need an SMEM input.
@functools.partial(jax.jit, static_argnames=("weight", "gamma"))
def focal_loss(gt, logits, weight=None, gamma=2.0):
    """Focal loss, mean over all pixels.

    gt:     [B, 1, H, W] class labels (float {0,1} also accepted when C == 1).
    logits: [B, C, H, W] raw model outputs.
    weight: None, or a tuple of per-class weights (length 2 when C == 1, else length C).
    gamma:  focal exponent.
    """
    assert logits.ndim == 4 and gt.ndim == 4 and gt.shape[1] == 1
    assert gt.shape[0] == logits.shape[0] and gt.shape[2:] == logits.shape[2:]
    num_classes = logits.shape[1]
    if weight is not None:
        assert len(weight) == (2 if num_classes == 1 else num_classes)
    if num_classes == 1:
        return _focal_binary(gt, logits, weight, gamma)
    return _focal_multiclass(gt, logits, weight, gamma)


# ----------------------------------------------------------------------------
# Pure-JAX reference (direct transcription of the PyTorch forward), for checking.
# ----------------------------------------------------------------------------
def _focal_ref(gt, logits, weight, gamma):
    num_classes = logits.shape[1]
    gt_i = gt.astype(jnp.int32)
    if num_classes == 1:
        num_classes = 2
        gt_1_hot = jax.nn.one_hot(gt_i[:, 0], 2, dtype=jnp.float32)        # [B,H,W,2]
        pos = jax.nn.sigmoid(logits.astype(jnp.float32))
        probas = jnp.concatenate([1.0 - pos, pos], axis=1)                 # [B,2,H,W]
        probas = jnp.transpose(probas, (0, 2, 3, 1))
    else:
        gt_1_hot = jax.nn.one_hot(gt_i[:, 0], num_classes, dtype=jnp.float32)
        probas = jnp.transpose(jax.nn.softmax(logits.astype(jnp.float32), axis=1),
                               (0, 2, 3, 1))
    gt_1_hot = gt_1_hot.reshape(-1, num_classes)
    probas = probas.reshape(-1, num_classes)
    pt = jnp.sum(gt_1_hot * probas, axis=1)
    loss = -jnp.power(1.0 - pt, gamma) * jnp.log(pt)
    if weight is not None:
        w = jnp.asarray(weight, jnp.float32)
        loss = loss * jnp.transpose(w[gt_i], (0, 2, 3, 1)).reshape(-1)
    return jnp.mean(loss)


if __name__ == "__main__":
    key = jax.random.PRNGKey(0)
    k1, k2, k3, k4, k5, k6 = jax.random.split(key, 6)

    # --- binary (C == 1, sigmoid) path, small shape ------------------------------
    B, H, W = 2, 16, 16
    logits1 = jax.random.normal(k1, (B, 1, H, W), jnp.float32) * 2.0
    gt1 = (jax.random.uniform(k2, (B, 1, H, W)) > 0.5).astype(jnp.float32)

    out1 = jax.block_until_ready(focal_loss(gt1, logits1, weight=(1.0, 2.0), gamma=2.0))
    ref1 = _focal_ref(gt1, logits1, (1.0, 2.0), 2.0)
    assert jnp.allclose(out1, ref1, rtol=1e-4, atol=1e-6), (out1, ref1)

    out1u = jax.block_until_ready(focal_loss(gt1, logits1, weight=None, gamma=2.0))
    ref1u = _focal_ref(gt1, logits1, None, 2.0)
    assert jnp.allclose(out1u, ref1u, rtol=1e-4, atol=1e-6), (out1u, ref1u)

    # --- binary path, multi-tile / 2-way-split grid (exercises grid=(2, 2)) ------
    B2, H2, W2 = 4, 256, 320
    logits2 = jax.random.normal(k3, (B2, 1, H2, W2), jnp.float32) * 2.0
    gt2 = (jax.random.uniform(k4, (B2, 1, H2, W2)) > 0.5).astype(jnp.float32)

    out2 = jax.block_until_ready(focal_loss(gt2, logits2, weight=(1.0, 2.0), gamma=2.0))
    ref2 = _focal_ref(gt2, logits2, (1.0, 2.0), 2.0)
    assert jnp.allclose(out2, ref2, rtol=1e-4, atol=1e-6), (out2, ref2)

    # --- multi-class (softmax) path, small shape ----------------------------------
    C = 4
    logits3 = jax.random.normal(k5, (B, C, H, W), jnp.float32) * 2.0
    gt3 = jax.random.randint(k6, (B, 1, H, W), 0, C)

    out3 = jax.block_until_ready(
        focal_loss(gt3, logits3, weight=(1.0, 0.5, 2.0, 1.5), gamma=2.0))
    ref3 = _focal_ref(gt3, logits3, (1.0, 0.5, 2.0, 1.5), 2.0)
    assert jnp.allclose(out3, ref3, rtol=1e-4, atol=1e-6), (out3, ref3)

    print("KERNEL_OK")
</pallas_src>

<mosaic_0001>
module attributes {stable_mosaic.version = 11 : i64} {
  func.func @_focal_bin_kernel(%arg0: i32, %arg1: i32, %arg2: memref<8x128xbf16, #tpu.memory_space<vmem>>, %arg3: memref<8x128xf32, #tpu.memory_space<vmem>>, %arg4: memref<8x128xf32, #tpu.memory_space<vmem>>) attributes {dimension_semantics = [#tpu.dimension_semantics<parallel>, #tpu.dimension_semantics<arbitrary>], iteration_bounds = array<i64: 1, 1>, scalar_prefetch = 0 : i64, scratch_operands = 0 : i64, tpu.core_type = #tpu.core_type<tc>, window_params = [{transform_indices = @transform_0, window_bounds = array<i64: 8, 128>}, {transform_indices = @transform_1, window_bounds = array<i64: 8, 128>}, {transform_indices = @transform_2, window_bounds = array<i64: 8, 128>}]} {
    %c0_i32 = arith.constant 0 : i32
    %0 = arith.cmpi eq, %arg1, %c0_i32 : i32
    %1 = arith.extui %0 : i1 to i32
    %c0_i32_0 = arith.constant 0 : i32
    %2 = arith.cmpi ne, %1, %c0_i32_0 : i32
    scf.if %2 {
      %cst_17 = arith.constant 0.000000e+00 : f32
      %38 = vector.broadcast %cst_17 : f32 to vector<8x128xf32>
      %c0_18 = arith.constant 0 : index
      %c0_19 = arith.constant 0 : index
      %39 = vector.load %arg4[%c0_18, %c0_19] : memref<8x128xf32, #tpu.memory_space<vmem>>, vector<8x128xf32>
      tpu.vector_store %arg4[%c0_18, %c0_19], %38 {strides = array<i32>} : memref<8x128xf32, #tpu.memory_space<vmem>>, vector<8x128xf32>,
    } else {
    }
    %c0 = arith.constant 0 : index
    %c0_1 = arith.constant 0 : index
    %3 = vector.load %arg3[%c0, %c0_1] : memref<8x128xf32, #tpu.memory_space<vmem>>, vector<8x128xf32>
    %c0_2 = arith.constant 0 : index
    %c0_3 = arith.constant 0 : index
    %4 = vector.load %arg2[%c0_2, %c0_3] : memref<8x128xbf16, #tpu.memory_space<vmem>>, vector<8x128xbf16>
    %5 = arith.extf %4 : vector<8x128xbf16> to vector<8x128xf32>
    %cst = arith.constant 2.000000e+00 : f32
    %6 = vector.broadcast %cst : f32 to vector<8x128xf32>
    %7 = arith.mulf %6, %5 : vector<8x128xf32>
    %cst_4 = arith.constant 1.000000e+00 : f32
    %8 = vector.broadcast %cst_4 : f32 to vector<8x128xf32>
    %9 = arith.subf %7, %8 : vector<8x128xf32>
    %10 = arith.mulf %9, %3 : vector<8x128xf32>
    %cst_5 = arith.constant 0.000000e+00 : f32
    %11 = vector.broadcast %cst_5 : f32 to vector<8x128xf32>
    %12 = arith.subf %11, %10 : vector<8x128xf32>
    %cst_6 = arith.constant 0.000000e+00 : f32
    %13 = vector.broadcast %cst_6 : f32 to vector<8x128xf32>
    %14 = arith.maximumf %12, %13 : vector<8x128xf32>
    %15 = math.absf %10 : vector<8x128xf32>
    %cst_7 = arith.constant 0.000000e+00 : f32
    %16 = vector.broadcast %cst_7 : f32 to vector<8x128xf32>
    %17 = arith.subf %16, %15 : vector<8x128xf32>
    %18 = math.exp %17 : vector<8x128xf32>
    %19 = math.log1p %18 : vector<8x128xf32>
    %20 = arith.addf %14, %19 : vector<8x128xf32>
    %cst_8 = arith.constant 0.000000e+00 : f32
    %21 = vector.broadcast %cst_8 : f32 to vector<8x128xf32>
    %22 = arith.subf %21, %20 : vector<8x128xf32>
    %23 = math.exp %22 : vector<8x128xf32>
    %cst_9 = arith.constant 1.000000e+00 : f32
    %24 = vector.broadcast %cst_9 : f32 to vector<8x128xf32>
    %25 = arith.subf %24, %23 : vector<8x128xf32>
    %26 = arith.mulf %25, %25 : vector<8x128xf32>
    %cst_10 = arith.constant 0.000000e+00 : f32
    %27 = vector.broadcast %cst_10 : f32 to vector<8x128xf32>
    %28 = arith.subf %27, %26 : vector<8x128xf32>
    %29 = arith.mulf %28, %22 : vector<8x128xf32>
    %cst_11 = arith.constant 1.000000e+00 : f32
    %30 = vector.broadcast %cst_11 : f32 to vector<8x128xf32>
    %31 = arith.mulf %30, %5 : vector<8x128xf32>
    %cst_12 = arith.constant 1.000000e+00 : f32
    %32 = vector.broadcast %cst_12 : f32 to vector<8x128xf32>
    %33 = arith.addf %32, %31 : vector<8x128xf32>
    %34 = arith.mulf %29, %33 : vector<8x128xf32>
    %c0_13 = arith.constant 0 : index
    %c0_14 = arith.constant 0 : index
    %35 = vector.load %arg4[%c0_13, %c0_14] : memref<8x128xf32, #tpu.memory_space<vmem>>, vector<8x128xf32>
    %36 = arith.addf %35, %34 : vector<8x128xf32>
    %c0_15 = arith.constant 0 : index
    %c0_16 = arith.constant 0 : index
    %37 = vector.load %arg4[%c0_15, %c0_16] : memref<8x128xf32, #tpu.memory_space<vmem>>, vector<8x128xf32>
    tpu.vector_store %arg4[%c0_15, %c0_16], %36 {strides = array<i32>} : memref<8x128xf32, #tpu.memory_space<vmem>>, vector<8x128xf32>,
    return
  }
  func.func @transform_0(%arg0: i32, %arg1: i32) -> (i32, i32) {
    %c1_i32 = arith.constant 1 : i32
    %0 = arith.muli %arg0, %c1_i32 : i32
    %1 = arith.addi %0, %arg1 : i32
    %c0_i32 = arith.constant 0 : i32
    %c0_i32_0 = arith.constant 0 : i32
    return %1, %c0_i32 : i32, i32
  }
  func.func @transform_1(%arg0: i32, %arg1: i32) -> (i32, i32) {
    %c1_i32 = arith.constant 1 : i32
    %0 = arith.muli %arg0, %c1_i32 : i32
    %1 = arith.addi %0, %arg1 : i32
    %c0_i32 = arith.constant 0 : i32
    %c0_i32_0 = arith.constant 0 : i32
    return %1, %c0_i32 : i32, i32
  }
  func.func @transform_2(%arg0: i32, %arg1: i32) -> (i32, i32) {
    %c0_i32 = arith.constant 0 : i32
    %c0_i32_0 = arith.constant 0 : i32
    return %arg0, %c0_i32 : i32, i32
  }
}

</mosaic_0001>

<llo_original>
// kernel: focal_loss.1
$region0: #{focal_loss.1}
  #allocation0 [shape = 'u32[]', space=smem, size = 0x4, offset = 0x4, fixed_abs, tag = 'smem constant byte address 0x4 - core index']
  #allocation1 [shape = 'u32[144,128]{1,0:T(1,128)}', space=vmem, size = 0x12000, scoped, tag = 'internal scratch']
  %s0 = inlined_call_operand.vmem [shape: bf16[8,128], index: 0, kind: input, shape index: {}]
  %s1 = inlined_call_operand.vmem [shape: f32[8,128], index: 1, kind: input, shape index: {}]
  %s2 = inlined_call_operand.vmem [shape: f32[8,128], index: 2, kind: output, shape index: {}]
  %s3 = sld [smem:[#allocation0]]
  $region22: #{focal_loss.1} parent=0
    _
  %s5 = ssub.s32 1, %s3
  %s6 = scalar_select 0, %s5, %s3
  // Predicated region
  $region2: #{focal_loss.1} parent=0 // pred_check
    _
  $region3: #{focal_loss.1} parent=0 // pred_check_branch
    %8 = sbr.rel (0) target = $region5
  $region4: #{focal_loss.1} parent=0 // pred_region
    %s9 = sadd.s32 0, 0
    %p10 = scmp.lt.s32.totalorder %s9, 0
    %s11 = scalar_select %p10, %s9, 0
    %s12 = smul.addr %s11, 4
    %s13 = scalar_lea.vmem %s0, %s12
    %s14 = sadd.s32 0, 0
  $region5: #{focal_loss.1} parent=0 // pred_fallthru
    _
  // Predicated region
  $region6: #{focal_loss.1} parent=0 // pred_check
    _
  $region7: #{focal_loss.1} parent=0 // pred_check_branch
    %16 = sbr.rel (0) target = $region9
  $region8: #{focal_loss.1} parent=0 // pred_region
    %s17 = sadd.s32 0, 0
    %p18 = scmp.lt.s32.totalorder %s17, 0
    %s19 = scalar_select %p18, %s17, 0
    %s20 = smul.addr %s19, 8
    %s21 = scalar_lea.vmem %s1, %s20
    %s22 = sadd.s32 0, 0
  $region9: #{focal_loss.1} parent=0 // pred_fallthru
    _
  %s23 = sadd.s32 0, 0
  %p24 = scmp.lt.s32.totalorder %s23, 0
  %s25 = scalar_select %p24, %s23, 0
  %s26 = smul.addr %s25, 4
  %s27 = scalar_lea.vmem %s0, %s26
  %s28 = sadd.s32 0, 0
  %p29 = scmp.lt.s32.totalorder %s28, 0
  %s30 = scalar_select %p29, %s28, 0
  %s31 = smul.addr %s30, 8
  %s32 = scalar_lea.vmem %s1, %s31
  %s33 = sadd.s32 0, 0
  %p34 = scmp.lt.s32.totalorder %s33, 0
  %s35 = scalar_select %p34, %s33, 0
  %s36 = smul.addr %s35, 4
  %s37 = scalar_lea.vmem %s0, %s36
  %s38 = sadd.s32 0, 0
  %s39 = sadd.s32 0, 0
  %p40 = scmp.lt.s32.totalorder %s39, 0
  %s41 = scalar_select %p40, %s39, 0
  %s42 = smul.addr %s41, 8
  %s43 = scalar_lea.vmem %s1, %s42
  %s44 = sadd.s32 0, 0
  %p45 = scmp.eq.s32.totalorder 0, 0
  // Predicated region
  $region10: #{focal_loss.1} parent=0 // pred_check
    %p46 = pneg %p45
  $region11: #{focal_loss.1} parent=0 // pred_check_branch
    %48 = sbr.rel (%p46) target = $region13
  $region12: #{focal_loss.1} parent=0 // pred_region
    %49 = vst [vmem:[%s2] sm:$0xff] 0.0
  $region13: #{focal_loss.1} parent=0 // pred_fallthru
    _
  %v50 = vld [vmem:[%s43] sm:$0xff]
  %v51 = vld [vmem:[%s37] sm:$0xf]
  %v52 = vunpack.c.l.bf16 %v51
  %v53 = vmul.f32 %v52, 2.0
  %v54 = vsub.f32 %v53, 1.0
  %v55 = vmul.f32 %v54, %v50
  %v56 = vsub.f32 0.0, %v55
  %v57 = vmax.f32 %v56, 0.0
  %v58 = vand.u32 2147483647, %v55
  %v59 = vsub.f32 0.0, %v58
  %v60 = vmul.f32 %v59, 1.442695
  %v61 = vpow.pop %v60
  %v62 = vadd.f32 %v61, 1.0
  %v63 = vlog2.pop %v62
  %v64 = vmul.f32 %v63, 0.6931472
  %v65 = vmul.f32 -0.5, %v61
  %v66 = vadd.f32 %v65, 1.0
  %v67 = vmul.f32 %v66, %v61
  %v68 = vand.u32 2147483647, %v61
  %vm69 = vcmp.lt.f32.partialorder %v68, 0.0004427343
  %v70 = vsel %vm69, %v67, %v64
  %v71 = vadd.f32 %v57, %v70
  %v72 = vsub.f32 0.0, %v71
  %v73 = vmul.f32 %v72, 1.442695
  %v74 = vpow.pop %v73
  %v75 = vsub.f32 1.0, %v74
  %v76 = vmul.f32 %v75, %v75
  %v77 = vsub.f32 0.0, %v76
  %v78 = vmul.f32 %v77, %v72
  %v79 = vadd.f32 %v52, 1.0
  %v80 = vmul.f32 %v78, %v79
  %v81 = vld [vmem:[%s2] sm:$0xff]
  %v82 = vadd.f32 %v81, %v80
  %83 = vst [vmem:[%s2] sm:$0xff] %v82
  // Predicated region
  $region14: #{focal_loss.1} parent=0 // pred_check
    _
  $region15: #{focal_loss.1} parent=0 // pred_check_branch
    %85 = sbr.rel (0) target = $region17
  $region16: #{focal_loss.1} parent=0 // pred_region
    _
  $region17: #{focal_loss.1} parent=0 // pred_fallthru
    _
  // Predicated region
  $region18: #{focal_loss.1} parent=0 // pred_check
    _
  $region19: #{focal_loss.1} parent=0 // pred_check_branch
    %87 = sbr.rel (0) target = $region21
  $region20: #{focal_loss.1} parent=0 // pred_region
    _
  $region21: #{focal_loss.1} parent=0 // pred_fallthru
    _

</llo_original>
